<compile_context>
chip_gen: v7x
topology: tpu7x:2x2x1
jax: 0.10.0
libtpu: 0.0.40
codegen_flags: <defaults>
</compile_context>

<pallas_src>
import jax
import jax.numpy as jnp
from jax.experimental import pallas as pl
from jax.experimental.pallas import tpu as pltpu

NEG_SLOPE = 0.1   # LeakyReLU negative_slope (act_cfg default)
BN_EPS = 1e-5     # BatchNorm2d eps


def _leaky(y):
    return jnp.where(y >= 0, y, NEG_SLOPE * y)


def _fold_bn(w, gamma, beta, mean, var):
    """Fold eval-mode BN scale into the conv weight (bf16 MXU operand) and bias (f32)."""
    scale = gamma / jnp.sqrt(var + BN_EPS)
    w_f = (w * scale.reshape((-1,) + (1,) * (w.ndim - 1))).astype(jnp.bfloat16)
    bias = (beta - mean * scale).reshape(-1, 1).astype(jnp.float32)
    return w_f, bias


# ----------------------------- 1x1 ConvBlock --------------------------------

def _conv1x1_kernel(x_ref, w_ref, b_ref, o_ref):
    """x_ref (Cin, L) f32 | w_ref (Cout, Cin) bf16 | b_ref (Cout, 1) f32 | o_ref (Cout, L)."""
    y = jnp.dot(w_ref[...], x_ref[...].astype(jnp.bfloat16),
                preferred_element_type=jnp.float32)
    y = y + b_ref[...]
    o_ref[...] = _leaky(y).astype(o_ref.dtype)


def conv1x1_block(x_nchw, w_oc_ic, gamma, beta, mean, var):
    n, c_in, h, w = x_nchw.shape
    c_out = w_oc_ic.shape[0]
    w_f, bias = _fold_bn(w_oc_ic, gamma, beta, mean, var)
    l = h * w
    x_flat = x_nchw.reshape(n, c_in, l)          # free view of contiguous NCHW
    out = pl.pallas_call(
        _conv1x1_kernel,
        out_shape=jax.ShapeDtypeStruct((n, c_out, l), x_nchw.dtype),
        grid=(n,),
        in_specs=[
            pl.BlockSpec((None, c_in, l), lambda i: (i, 0, 0)),
            pl.BlockSpec((c_out, c_in), lambda i: (0, 0)),    # resident weight
            pl.BlockSpec((c_out, 1), lambda i: (0, 0)),       # resident bias
        ],
        out_specs=pl.BlockSpec((None, c_out, l), lambda i: (i, 0, 0)),
        compiler_params=pltpu.CompilerParams(dimension_semantics=("parallel",)),
    )(x_flat, w_f, bias)
    return out.reshape(n, c_out, h, w)


# ----------------------------- 3x3 ConvBlock --------------------------------

def _conv3x3_kernel(x_ref, w_ref, b_ref, o_ref):
    """x_ref (Cin, H+2, W+2) f32 padded | w_ref (3, 3, Cout, Cin) bf16 |
    b_ref (Cout, 1) f32 | o_ref (Cout, H, W) f32."""
    c_out, h, w = o_ref.shape
    b = b_ref[...]
    taps = [[w_ref[dy, dx] for dx in range(3)] for dy in range(3)]   # 9 x (Cout, Cin) bf16
    for r in range(h):
        acc = jnp.zeros((c_out, w), jnp.float32)
        for dy in range(3):
            row = x_ref[:, r + dy, :].astype(jnp.bfloat16)           # (Cin, W+2)
            for dx in range(3):
                acc = acc + jnp.dot(taps[dy][dx], row[:, dx:dx + w],
                                    preferred_element_type=jnp.float32)
        o_ref[:, r, :] = _leaky(acc + b).astype(o_ref.dtype)


def conv3x3_block(x_nchw, w_oihw, gamma, beta, mean, var):
    n, c_in, h, w = x_nchw.shape
    c_out = w_oihw.shape[0]
    scale = gamma / jnp.sqrt(var + BN_EPS)
    w_f = jnp.transpose(w_oihw * scale[:, None, None, None],
                        (2, 3, 0, 1)).astype(jnp.bfloat16)           # (3, 3, Cout, Cin)
    bias = (beta - mean * scale).reshape(c_out, 1).astype(jnp.float32)
    x_pad = jnp.pad(x_nchw, ((0, 0), (0, 0), (1, 1), (1, 1)))        # pad=1 halo
    return pl.pallas_call(
        _conv3x3_kernel,
        out_shape=jax.ShapeDtypeStruct((n, c_out, h, w), x_nchw.dtype),
        grid=(n,),
        in_specs=[
            pl.BlockSpec((None, c_in, h + 2, w + 2), lambda i: (i, 0, 0, 0)),
            pl.BlockSpec((3, 3, c_out, c_in), lambda i: (0, 0, 0, 0)),
            pl.BlockSpec((c_out, 1), lambda i: (0, 0)),
        ],
        out_specs=pl.BlockSpec((None, c_out, h, w), lambda i: (i, 0, 0, 0)),
        compiler_params=pltpu.CompilerParams(dimension_semantics=("parallel",)),
    )(x_pad, w_f, bias)


# -------------------- YoloNeckUpsample (conv + up2x + concat) ----------------

def _upsample_concat_kernel(x_ref, feat_ref, w_ref, b_ref, e_ref, o_ref):
    """Fused 1x1 conv (+folded BN + LeakyReLU) + 2x nearest upsample + concat.

    x_ref:    (Cin,  TH,   W )    f32  activation row-tile (one image)
    feat_ref: (Cf,  2TH,  2W )    f32  backbone feature tile (pass-through)
    w_ref:    (Cout, Cin)         bf16 conv weight with BN scale folded in
    b_ref:    (Cout, 1)           f32  folded BN bias
    e_ref:    (W,   2W)           f32  exact 0/1 nearest-upsample matrix
    o_ref:    (Cout+Cf, 2TH, 2W)  f32  output tile (conv+up -> [:Cout], feat -> [Cout:])
    """
    c_out = w_ref.shape[0]
    n_rows = x_ref.shape[1]

    w = w_ref[...]
    b = b_ref[...]
    e = e_ref[...]

    # torch.cat((x, ori_feat), dim=1): backbone feature goes straight through.
    o_ref[c_out:] = feat_ref[...]

    for r in range(n_rows):
        xr = x_ref[:, r, :].astype(jnp.bfloat16)                     # (Cin, W)
        y = jnp.dot(w, xr, preferred_element_type=jnp.float32)       # (Cout, W) MXU, f32 acc
        y = _leaky(y + b)                                            # folded BN + LeakyReLU
        # 2x nearest along W: y @ E with E[w, 2w+j] = 1 — exact duplication on the
        # otherwise-idle MXU; avoids any cross-lane interleave relayout.
        y2 = jnp.dot(y, e, preferred_element_type=jnp.float32).astype(o_ref.dtype)
        # 2x nearest along H: each computed row feeds two adjacent output rows.
        o_ref[:c_out, 2 * r, :] = y2
        o_ref[:c_out, 2 * r + 1, :] = y2


def _pick_row_tile(h, w, c_in, c_feat, c_out, itemsize=4,
                   budget_bytes=16 * 1024 * 1024):
    """Largest row tile TH (divisor of H, multiple of 8 or H itself, so every block
    satisfies the (8,128) rule with zero padding) whose double-buffered streaming
    working set fits a conservative VMEM budget (safe on v7x's 64 MiB VMEM)."""
    def working_set(th):
        x_tile = c_in * th * w
        feat_tile = c_feat * (2 * th) * (2 * w)
        out_tile = (c_out + c_feat) * (2 * th) * (2 * w)
        return 2 * (x_tile + feat_tile + out_tile) * itemsize  # x2: double buffering
    cands = sorted({h} | {d for d in range(8, h + 1, 8) if h % d == 0},
                   reverse=True)
    for th in cands:
        if working_set(th) <= budget_bytes:
            return th
    return cands[-1]


def yolo_neck_upsample(x_nchw, ori_feat_nchw, w_oc_ic, gamma, beta, mean, var,
                       *, row_tile=None):
    """YoloNeckUpsample.forward — NCHW in, NCHW out (concat on dim 1)."""
    n, c_in, h, w = x_nchw.shape
    nf, c_feat, h2, w2 = ori_feat_nchw.shape
    assert nf == n and h2 == 2 * h and w2 == 2 * w
    c_out = w_oc_ic.shape[0]
    c_tot = c_out + c_feat

    w_folded, bias = _fold_bn(w_oc_ic, gamma, beta, mean, var)

    # Exact nearest-neighbour duplication matrix along W: E[w, 2w+j] = 1, j in {0,1}.
    dup = (jnp.arange(2 * w)[None, :] // 2
           == jnp.arange(w)[:, None]).astype(jnp.float32)            # (W, 2W)

    th = row_tile if row_tile is not None else _pick_row_tile(h, w, c_in, c_feat, c_out)
    assert h % th == 0 and (th == h or th % 8 == 0), "invalid row tile"
    grid = (n, h // th)   # both axes independent -> megacore / dual-TC sharding

    return pl.pallas_call(
        _upsample_concat_kernel,
        out_shape=jax.ShapeDtypeStruct((n, c_tot, 2 * h, 2 * w), x_nchw.dtype),
        grid=grid,
        in_specs=[
            pl.BlockSpec((None, c_in, th, w), lambda ni, ri: (ni, 0, ri, 0)),
            pl.BlockSpec((None, c_feat, 2 * th, 2 * w), lambda ni, ri: (ni, 0, ri, 0)),
            pl.BlockSpec((c_out, c_in), lambda ni, ri: (0, 0)),
            pl.BlockSpec((c_out, 1), lambda ni, ri: (0, 0)),
            pl.BlockSpec((w, 2 * w), lambda ni, ri: (0, 0)),
        ],
        out_specs=pl.BlockSpec((None, c_tot, 2 * th, 2 * w),
                               lambda ni, ri: (ni, 0, ri, 0)),
        compiler_params=pltpu.CompilerParams(
            dimension_semantics=("parallel", "parallel")),
    )(x_nchw, ori_feat_nchw, w_folded, bias, dup)


# ----------------------------- full neck forward ----------------------------

def _convblock_apply(x, p):
    if p["w"].ndim == 2:
        return conv1x1_block(x, p["w"], p["gamma"], p["beta"], p["mean"], p["var"])
    return conv3x3_block(x, p["w"], p["gamma"], p["beta"], p["mean"], p["var"])


def yolov3_neck_forward(feats, params):
    """Mirror of Yolov3Neck.forward (tuple of per-scale outputs)."""
    num_scales = len(feats)
    outs = []
    x = feats[-1]
    for p in params["conv_blocks"][0]:
        x = _convblock_apply(x, p)
    outs.append(x)
    for i in range(num_scales - 1):
        up = params["upsample"][i]
        x = yolo_neck_upsample(x, feats[num_scales - i - 2],
                               up["w"], up["gamma"], up["beta"], up["mean"], up["var"])
        for p in params["conv_blocks"][i + 1]:
            x = _convblock_apply(x, p)
        outs.append(x)
    return tuple(outs)


# ------------------------------ param building ------------------------------

def _init_convblock(key, c_in, c_out, ksize):
    kw, kg, kb, km, kv = jax.random.split(key, 5)
    shape = (c_out, c_in) if ksize == 1 else (c_out, c_in, 3, 3)
    return dict(
        w=0.1 * jax.random.normal(kw, shape, jnp.float32),
        gamma=1.0 + 0.1 * jax.random.normal(kg, (c_out,), jnp.float32),
        beta=0.1 * jax.random.normal(kb, (c_out,), jnp.float32),
        mean=0.1 * jax.random.normal(km, (c_out,), jnp.float32),
        var=jnp.abs(jax.random.normal(kv, (c_out,), jnp.float32)) + 0.5,
    )


def init_yolov3_neck_params(key, in_channels, out_channels):
    num_scales = len(in_channels)
    conv_blocks, upsamples = [], []
    last_out = 0
    for i in range(num_scales):
        c_in = in_channels[num_scales - i - 1] + last_out // 2
        c_out = out_channels[i]
        plan = [(c_in, c_out, 1), (c_out, 2 * c_out, 3), (2 * c_out, c_out, 1),
                (c_out, 2 * c_out, 3), (2 * c_out, c_out, 1)]
        blocks = []
        for (ci, co, k) in plan:
            key, sub = jax.random.split(key)
            blocks.append(_init_convblock(sub, ci, co, k))
        conv_blocks.append(blocks)
        last_out = c_out
    for i in range(num_scales - 1):
        key, sub = jax.random.split(key)
        upsamples.append(_init_convblock(sub, out_channels[i], out_channels[i] // 2, 1))
    return dict(conv_blocks=conv_blocks, upsample=upsamples)


# ------------------------------- references ---------------------------------

def _ref_convblock(x, p, bf16):
    w, gamma, beta, mean, var = p["w"], p["gamma"], p["beta"], p["mean"], p["var"]
    scale = gamma / jnp.sqrt(var + BN_EPS)
    bias = beta - mean * scale
    wf = w * scale.reshape((-1,) + (1,) * (w.ndim - 1))
    if bf16:
        wf = wf.astype(jnp.bfloat16)
        xin = x.astype(jnp.bfloat16)
    else:
        xin = x
    if w.ndim == 2:
        y = jnp.einsum("oc,nchw->nohw", wf, xin, preferred_element_type=jnp.float32)
    else:
        y = jax.lax.conv_general_dilated(
            xin, wf, window_strides=(1, 1), padding=((1, 1), (1, 1)),
            dimension_numbers=("NCHW", "OIHW", "NCHW"),
            preferred_element_type=jnp.float32)
    y = y + bias[None, :, None, None]
    return _leaky(y)


def ref_yolov3_neck_forward(feats, params, *, bf16):
    num_scales = len(feats)
    outs = []
    x = feats[-1]
    for p in params["conv_blocks"][0]:
        x = _ref_convblock(x, p, bf16)
    outs.append(x)
    for i in range(num_scales - 1):
        up = params["upsample"][i]
        y = _ref_convblock(x, up, bf16)
        y = jnp.repeat(jnp.repeat(y, 2, axis=2), 2, axis=3)
        x = jnp.concatenate([y, feats[num_scales - i - 2]], axis=1)
        for p in params["conv_blocks"][i + 1]:
            x = _ref_convblock(x, p, bf16)
        outs.append(x)
    return tuple(outs)


# ---------------------------------- main -------------------------------------

if __name__ == "__main__":
    key = jax.random.PRNGKey(0)
    N = 2
    in_channels = (8, 16, 32)     # feats[0] (largest spatial) ... feats[2] (smallest)
    out_channels = (16, 8, 4)
    spatial = (16, 8, 4)          # feats[i] spatial size

    key, k0, k1, k2, kp = jax.random.split(key, 5)
    feats = [
        jax.random.normal(k0, (N, in_channels[0], spatial[0], spatial[0]), jnp.float32),
        jax.random.normal(k1, (N, in_channels[1], spatial[1], spatial[1]), jnp.float32),
        jax.random.normal(k2, (N, in_channels[2], spatial[2], spatial[2]), jnp.float32),
    ]
    params = init_yolov3_neck_params(kp, in_channels, out_channels)

    outs = yolov3_neck_forward(feats, params)
    outs = jax.block_until_ready(outs)

    expected = [(N, 16, 4, 4), (N, 8, 8, 8), (N, 4, 16, 16)]
    for o, s in zip(outs, expected):
        assert o.shape == s, (o.shape, s)

    # Tight check against a reference using the kernel's exact numerics
    # (folded BN, bf16 MXU operands, f32 accumulate/epilogue).
    ref_b = ref_yolov3_neck_forward(feats, params, bf16=True)
    for o, r in zip(outs, ref_b):
        assert bool(jnp.allclose(o, r, atol=2e-2, rtol=2e-2)), "mismatch vs bf16-numerics ref"

    # Loose check against the pure-f32 PyTorch-equivalent forward; the gap is only
    # the standard bf16 rounding of the MXU operands accumulated over the layers.
    ref_f = ref_yolov3_neck_forward(feats, params, bf16=False)
    for o, r in zip(outs, ref_f):
        assert bool(jnp.allclose(o, r, atol=1e-1, rtol=1e-1)), "mismatch vs f32 module ref"

    print("KERNEL_OK")
</pallas_src>

<mosaic_0001>
module attributes {stable_mosaic.version = 11 : i64} {
  func.func @_conv1x1_kernel(%arg0: i32, %arg1: memref<1x32x16xf32, #tpu.memory_space<vmem>>, %arg2: memref<16x32xbf16, #tpu.memory_space<vmem>>, %arg3: memref<16x1xf32, #tpu.memory_space<vmem>>, %arg4: memref<1x16x16xf32, #tpu.memory_space<vmem>>) attributes {dimension_semantics = [#tpu.dimension_semantics<parallel>], iteration_bounds = array<i64: 2>, scalar_prefetch = 0 : i64, scratch_operands = 0 : i64, tpu.core_type = #tpu.core_type<tc>, window_params = [{transform_indices = @transform_0, window_bounds = array<i64: 1, 32, 16>}, {pipeline_mode = #tpu.pipeline_mode<synchronous>, transform_indices = @transform_1, window_bounds = array<i64: 16, 32>}, {pipeline_mode = #tpu.pipeline_mode<synchronous>, transform_indices = @transform_2, window_bounds = array<i64: 16, 1>}, {transform_indices = @transform_3, window_bounds = array<i64: 1, 16, 16>}]} {
    %c0 = arith.constant 0 : index
    %c0_0 = arith.constant 0 : index
    %0 = vector.load %arg2[%c0, %c0_0] : memref<16x32xbf16, #tpu.memory_space<vmem>>, vector<16x32xbf16>
    %c0_1 = arith.constant 0 : index
    %c0_2 = arith.constant 0 : index
    %c0_3 = arith.constant 0 : index
    %1 = vector.load %arg1[%c0_1, %c0_2, %c0_3] : memref<1x32x16xf32, #tpu.memory_space<vmem>>, vector<1x32x16xf32>
    %2 = vector.shape_cast %1 : vector<1x32x16xf32> to vector<32x16xf32>
    %3 = arith.truncf %2 : vector<32x16xf32> to vector<32x16xbf16>
    %cst = arith.constant dense<0.000000e+00> : vector<16x16xf32>
    %4 = tpu.matmul %0, %3, %cst {dimension_numbers = #tpu.dot_dimension_numbers<[1], [0], [0], [1], [0, 0, 1, 1], [], []>} : vector<16x32xbf16>, vector<32x16xbf16>, vector<16x16xf32> -> vector<16x16xf32>
    %c0_4 = arith.constant 0 : index
    %c0_5 = arith.constant 0 : index
    %5 = vector.load %arg3[%c0_4, %c0_5] : memref<16x1xf32, #tpu.memory_space<vmem>>, vector<16x1xf32>
    %6 = vector.broadcast %5 : vector<16x1xf32> to vector<16x16xf32>
    %7 = arith.addf %4, %6 : vector<16x16xf32>
    %cst_6 = arith.constant 0.000000e+00 : f32
    %8 = vector.broadcast %cst_6 : f32 to vector<16x16xf32>
    %9 = arith.cmpf oge, %7, %8 : vector<16x16xf32>
    %cst_7 = arith.constant 1.000000e-01 : f32
    %10 = vector.broadcast %cst_7 : f32 to vector<16x16xf32>
    %11 = arith.mulf %10, %7 : vector<16x16xf32>
    %12 = arith.select %9, %7, %11 : vector<16x16xi1>, vector<16x16xf32>
    %c0_8 = arith.constant 0 : index
    %c0_9 = arith.constant 0 : index
    %c0_10 = arith.constant 0 : index
    %13 = vector.load %arg4[%c0_8, %c0_9, %c0_10] : memref<1x16x16xf32, #tpu.memory_space<vmem>>, vector<1x16x16xf32>
    %14 = vector.shape_cast %13 : vector<1x16x16xf32> to vector<16x16xf32>
    %15 = vector.shape_cast %12 : vector<16x16xf32> to vector<1x16x16xf32>
    tpu.vector_store %arg4[%c0_8, %c0_9, %c0_10], %15 {strides = array<i32>} : memref<1x16x16xf32, #tpu.memory_space<vmem>>, vector<1x16x16xf32>,
    return
  }
  func.func @transform_0(%arg0: i32) -> (i32, i32, i32) {
    %c0_i32 = arith.constant 0 : i32
    %c0_i32_0 = arith.constant 0 : i32
    %c0_i32_1 = arith.constant 0 : i32
    return %arg0, %c0_i32, %c0_i32_0 : i32, i32, i32
  }
  func.func @transform_1(%arg0: i32) -> (i32, i32) {
    %c0_i32 = arith.constant 0 : i32
    %c0_i32_0 = arith.constant 0 : i32
    %c0_i32_1 = arith.constant 0 : i32
    return %c0_i32, %c0_i32_0 : i32, i32
  }
  func.func @transform_2(%arg0: i32) -> (i32, i32) {
    %c0_i32 = arith.constant 0 : i32
    %c0_i32_0 = arith.constant 0 : i32
    %c0_i32_1 = arith.constant 0 : i32
    return %c0_i32, %c0_i32_0 : i32, i32
  }
  func.func @transform_3(%arg0: i32) -> (i32, i32, i32) {
    %c0_i32 = arith.constant 0 : i32
    %c0_i32_0 = arith.constant 0 : i32
    %c0_i32_1 = arith.constant 0 : i32
    return %arg0, %c0_i32, %c0_i32_0 : i32, i32, i32
  }
}

</mosaic_0001>

<llo_original>
// kernel: tpu_custom_call.1
$region0: #{tpu_custom_call.1}
  #allocation0 [shape = 'u32[]', space=smem, size = 0x4, offset = 0x4, fixed_abs, tag = 'smem constant byte address 0x4 - core index']
  #allocation1 [shape = 'u32[144,128]{1,0:T(1,128)}', space=vmem, size = 0x12000, scoped, tag = 'internal scratch']
  %s0 = inlined_call_operand.vmem [shape: f32[2,32,16], index: 0, kind: input, shape index: {}]
  %s1 = inlined_call_operand.vmem [shape: bf16[16,32], index: 1, kind: input, shape index: {}]
  %s2 = inlined_call_operand.vmem [shape: f32[16,1], index: 2, kind: input, shape index: {}]
  %s3 = inlined_call_operand.hbm [shape: f32[2,16,16], index: 3, kind: output, shape index: {}]
  %s4 = sld [smem:[#allocation0]]
  $region45: #{tpu_custom_call.1} parent=0
    _
  %s6 = ssub.s32 1, %s4
  %s7 = scalar_select 0, %s6, %s4
  $region1: #{tpu_custom_call.1} parent=0
    #allocation2 [shape = 'u8[16384]{0}', space=vmem, size = 0x4000, scoped, tag = 'output window, operand 0']
    #allocation3 [shape = 's32[2]{0}', space=sflag, size = 0x8, scoped, tag = 'scoped memory for tpu_custom_call.1']
    %8 = vsyncpa [#allocation3], 0
    %s9 = scalar_lea.sflag [#allocation3], 1
    %10 = vsyncpa %s9, 0
    loop: start=0, step=1, limit=4
    $region2: #{tpu_custom_call.1} parent=1 // loop_pre_header
      _
    $region3: #{tpu_custom_call.1} parent=1 // loop_header
      %s12 = sphi 0, %s16
      %p13 = scmp.ge.s32.totalorder %s12, 4
      %s22 = sphi 0, %s24
      %s25 = sphi 0, %s22
      %s26 = sphi 0, %s25
      %s42 = sphi 0, %s26
      %s46 = sphi 0, %s46
      %s48 = sphi 0, %s46
      %s49 = sphi 0, %s48
      %s63 = sphi 0, %s49
      %s67 = sphi 0, %s67
      %s69 = sphi 0, %s67
      %s70 = sphi 0, %s69
      %s84 = sphi 0, %s70
      %s90 = sphi 0, %s92
      %s93 = sphi 0, %s90
      %s94 = sphi 0, %s93
      %s110 = sphi 0, %s94
    $region4: #{tpu_custom_call.1} parent=1 // loop_header_branch
      %15 = sbr.rel (%p13) target = $region8
    $region5: #{tpu_custom_call.1} parent=1 // loop_body
      %s17 = ssub.s32 %s12, 1
      %s18 = ssub.s32 %s12, 2
      %s19 = sadd.s32 %s12, 1
      %s20 = ssub.s32 %s12, %s19
      %p21 = scmp.eq.s32.totalorder %s20, 0
      %s23 = sadd.s32 %s22, 1
      %s24 = scalar_select %p21, %s22, %s23
      %p27 = pneg %p21
      %p28 = scmp.eq.s32.totalorder %s12, 1
      %p29 = por %p27, %p28
      %p30 = scmp.ne.s32.totalorder %s22, %s25
      %p31 = scmp.eq.s32.totalorder %s12, 0
      %p32 = por %p30, %p31
      %p33 = scmp.ne.s32.totalorder %s22, %s25
      %p34 = scmp.eq.s32.totalorder %s17, 1
      %p35 = por %p33, %p34
      %p36 = scmp.ne.s32.totalorder %s25, %s26
      %p37 = scmp.eq.s32.totalorder %s17, 0
      %p38 = por %p36, %p37
      %p39 = scmp.ne.s32.totalorder %s25, %s26
      %p40 = scmp.eq.s32.totalorder %s18, 1
      %p41 = por %p39, %p40
      %p43 = scmp.ne.s32.totalorder %s26, %s42
      %p44 = scmp.eq.s32.totalorder %s18, 0
      %p45 = por %p43, %p44
      %s47 = sadd.s32 %s46, 1
      %p50 = scmp.eq.s32.totalorder %s12, 1
      %p51 = scmp.ne.s32.totalorder %s46, %s48
      %p52 = scmp.eq.s32.totalorder %s12, 0
      %p53 = por %p51, %p52
      %p54 = scmp.ne.s32.totalorder %s46, %s48
      %p55 = scmp.eq.s32.totalorder %s17, 1
      %p56 = por %p54, %p55
      %p57 = scmp.ne.s32.totalorder %s48, %s49
      %p58 = scmp.eq.s32.totalorder %s17, 0
      %p59 = por %p57, %p58
      %p60 = scmp.ne.s32.totalorder %s48, %s49
      %p61 = scmp.eq.s32.totalorder %s18, 1
      %p62 = por %p60, %p61
      %p64 = scmp.ne.s32.totalorder %s49, %s63
      %p65 = scmp.eq.s32.totalorder %s18, 0
      %p66 = por %p64, %p65
      %s68 = sadd.s32 %s67, 1
      %p71 = scmp.eq.s32.totalorder %s12, 1
      %p72 = scmp.ne.s32.totalorder %s67, %s69
      %p73 = scmp.eq.s32.totalorder %s12, 0
      %p74 = por %p72, %p73
      %p75 = scmp.ne.s32.totalorder %s67, %s69
      %p76 = scmp.eq.s32.totalorder %s17, 1
      %p77 = por %p75, %p76
      %p78 = scmp.ne.s32.totalorder %s69, %s70
      %p79 = scmp.eq.s32.totalorder %s17, 0
      %p80 = por %p78, %p79
      %p81 = scmp.ne.s32.totalorder %s69, %s70
      %p82 = scmp.eq.s32.totalorder %s18, 1
      %p83 = por %p81, %p82
      %p85 = scmp.ne.s32.totalorder %s70, %s84
      %p86 = scmp.eq.s32.totalorder %s18, 0
      %p87 = por %p85, %p86
      %s88 = ssub.s32 %s12, %s19
      %p89 = scmp.eq.s32.totalorder %s88, 0
      %s91 = sadd.s32 %s90, 1
      %s92 = scalar_select %p89, %s90, %s91
      %p95 = pneg %p89
      %p96 = scmp.eq.s32.totalorder %s12, 1
      %p97 = por %p95, %p96
      %p98 = scmp.ne.s32.totalorder %s90, %s93
      %p99 = scmp.eq.s32.totalorder %s12, 0
      %p100 = por %p98, %p99
      %p101 = scmp.ne.s32.totalorder %s90, %s93
      %p102 = scmp.eq.s32.totalorder %s17, 1
      %p103 = por %p101, %p102
      %p104 = scmp.ne.s32.totalorder %s93, %s94
      %p105 = scmp.eq.s32.totalorder %s17, 0
      %p106 = por %p104, %p105
      %p107 = scmp.ne.s32.totalorder %s93, %s94
      %p108 = scmp.eq.s32.totalorder %s18, 1
      %p109 = por %p107, %p108
      %p111 = scmp.ne.s32.totalorder %s94, %s110
      %p112 = scmp.eq.s32.totalorder %s18, 0
      %p113 = por %p111, %p112
      %p114 = scmp.le.s32.totalorder 1, %s12
      %p115 = scmp.lt.s32.totalorder %s12, 3
      %p116 = pnand %p114, %p115
      %p117 = pneg %p116
      // Predicated region
      $region9: #{tpu_custom_call.1} parent=5 // pred_check
        _
      $region10: #{tpu_custom_call.1} parent=5 // pred_check_branch
        %119 = sbr.rel (%p116) target = $region12
      $region11: #{tpu_custom_call.1} parent=5 // pred_region
        %s120 = ssub.s32 %s12, 1
        // Predicated region
        $region13: #{tpu_custom_call.1} parent=11 // pred_check
          %p121 = pneg %p59
        $region14: #{tpu_custom_call.1} parent=11 // pred_check_branch
          %123 = sbr.rel (%p121) target = $region16
        $region15: #{tpu_custom_call.1} parent=11 // pred_region
          _
        $region16: #{tpu_custom_call.1} parent=11 // pred_fallthru
          _
        // Predicated region
        $region17: #{tpu_custom_call.1} parent=11 // pred_check
          %p124 = pneg %p80
        $region18: #{tpu_custom_call.1} parent=11 // pred_check_branch
          %126 = sbr.rel (%p124) target = $region20
        $region19: #{tpu_custom_call.1} parent=11 // pred_region
          _
        $region20: #{tpu_custom_call.1} parent=11 // pred_fallthru
          _
      $region12: #{tpu_custom_call.1} parent=5 // pred_fallthru
        _
      %p127 = scmp.lt.s32.totalorder %s12, 2
      // Predicated region
      $region21: #{tpu_custom_call.1} parent=5 // pred_check
        %p128 = pneg %p127
      $region22: #{tpu_custom_call.1} parent=5 // pred_check_branch
        %130 = sbr.rel (%p128) target = $region24
      $region23: #{tpu_custom_call.1} parent=5 // pred_region
        // Predicated region
        $region25: #{tpu_custom_call.1} parent=23 // pred_check
          %p131 = pneg %p32
        $region26: #{tpu_custom_call.1} parent=23 // pred_check_branch
          %133 = sbr.rel (%p131) target = $region28
        $region27: #{tpu_custom_call.1} parent=23 // pred_region
          %p134 = scmp.lt.s32.totalorder %s12, 1
          %s135 = scalar_select %p134, %s12, 1
          %s136 = smul.addr %s135, 4
          %s137 = smul.addr %s136, 8
          %s138 = scalar_lea.vmem %s0, %s137
        $region28: #{tpu_custom_call.1} parent=23 // pred_fallthru
          _
      $region24: #{tpu_custom_call.1} parent=5 // pred_fallthru
        _
      %p139 = scmp.le.s32.totalorder 1, %s12
      %p140 = scmp.lt.s32.totalorder %s12, 3
      %p141 = pnand %p139, %p140
      %p142 = pneg %p141
      // Predicated region
      $region29: #{tpu_custom_call.1} parent=5 // pred_check
        _
      $region30: #{tpu_custom_call.1} parent=5 // pred_check_branch
        %144 = sbr.rel (%p141) target = $region32
      $region31: #{tpu_custom_call.1} parent=5 // pred_region
        %s145 = ssub.s32 %s12, 1
        %p146 = scmp.lt.s32.totalorder %s17, 1
        %s147 = scalar_select %p146, %s17, 1
        %s148 = smul.addr %s147, 4
        %s149 = smul.addr %s148, 8
        %s150 = scalar_lea.vmem %s0, %s149
        %p151 = pneg %p38
        %p152 = pneg %p35
        %p153 = pneg %p59
        %p154 = pneg %p56
        %p155 = pneg %p80
        %p156 = pneg %p77
        %p157 = pneg %p106
        %p158 = pneg %p103
        %s159 = sand.u32 %s93, 1
        %s160 = scalar_lea.sflag [#allocation3], %s159
        %s161 = sand.u32 %s93, 1
        %s162 = smul.addr %s161, 16
        %s163 = scalar_lea.vmem [#allocation2], %s162
        %p164 = scmp.lt.s32.totalorder %s17, 1
        %s165 = scalar_select %p164, %s17, 1
        %s166 = smul.addr %s165, 4
        %s167 = smul.addr %s166, 8
        %s168 = scalar_lea.vmem %s0, %s167
        %v170 = vld [vmem:[%s1] sm:$0xf]
        %v171 = vld [vmem:[%s1 + $0x4] sm:$0xf]
        %v172 = vld [vmem:[%s168] sm:$0xff]
        %v173 = vld [vmem:[%s168 + $0x8] sm:$0xff]
        %v174 = vld [vmem:[%s168 + $0x10] sm:$0xff]
        %v175 = vld [vmem:[%s168 + $0x18] sm:$0xff]
        %v176 = vpack.c.bf16 %v173, %v172
        %v177 = vpack.c.bf16 %v175, %v174
        %v178 = vld [vmem:[%s2] sm:$0xff]
        %v179 = vld [vmem:[%s2 + $0x8] sm:$0xff]
        %181 = vset.pattern.permute.xlu0 0
        %182 = vperm.xlu0 %181, %v178
        %v183 = vpop.permute.xlu0 %182
        %186 = vset.pattern.permute.xlu0 0
        %187 = vperm.xlu0 %186, %v179
        %v188 = vpop.permute.xlu0 %187
        %v192 = vunpack.c.l.b16 %v170
        %v193 = vunpack.c.l.b16 %v171
        %v194 = vpack.c.b16 %v193, %v192
        %vm195 = vcmask 261120
        %v197 = vsel %vm195, %v194, 0
        %199 = vmatprep.subr.bf16.mxu0 0
        %200 = vmatpush1.bf16.msra.mxu0 %v176
        %201 = vmatprep.subr.bf16.mxu0 0
        %202 = vmatpush1.bf16.msra.mxu0 %v177
        %203 = vmatprep.subr.bf16.mxu0 0
        %204 = vmatpush1.bf16.msra.mxu0 0
        %205 = vmatprep.subr.bf16.mxu0 0
        %206 = vmatpush1.bf16.msra.mxu0 0
        %207 = vmatprep.subr.bf16.mxu0 0
        %208 = vmatpush1.bf16.msra.mxu0 0
        %209 = vmatprep.subr.bf16.mxu0 0
        %210 = vmatpush1.bf16.msra.mxu0 0
        %211 = vmatprep.subr.bf16.mxu0 0
        %212 = vmatpush1.bf16.msra.mxu0 0
        %213 = vmatprep.subr.bf16.mxu0 0
        %214 = vmatpush1.bf16.msra.mxu0 0
        %215 = vmatprep.subr.bf16.mxu0 0
        %216 = vmatpush1.bf16.msra.mxu0 0
        %217 = vmatprep.subr.bf16.mxu0 0
        %218 = vmatpush1.bf16.msra.mxu0 0
        %219 = vmatprep.subr.bf16.mxu0 0
        %220 = vmatpush1.bf16.msra.mxu0 0
        %221 = vmatprep.subr.bf16.mxu0 0
        %222 = vmatpush1.bf16.msra.mxu0 0
        %223 = vmatprep.subr.bf16.mxu0 0
        %224 = vmatpush1.bf16.msra.mxu0 0
        %225 = vmatprep.subr.bf16.mxu0 0
        %226 = vmatpush1.bf16.msra.mxu0 0
        %227 = vmatprep.subr.bf16.mxu0 0
        %228 = vmatpush1.bf16.msra.mxu0 0
        %229 = vmatprep.subr.bf16.mxu0 0
        %230 = vmatpush1.bf16.msra.mxu0 0
        %231 = vmatprep.mubr.bf16.mxu0 0
        %232 = vmatmul.mubr.bf16.gmra.mrb[0].mxu0 %v197
        %v233 = vpop.f32.mrb[0].mxu0
        %v234 = vadd.f32 %v183, %v233
        %v235 = vpop.f32.mrb[0].mxu0
        %v236 = vpop.f32.mrb[0].mxu0
        %v237 = vadd.f32 %v188, %v236
        %v238 = vpop.f32.mrb[0].mxu0
        %239 = vdwg.mxu0
        %vm240 = vcmp.ge.f32.partialorder %v234, 0.0
        %vm241 = vcmp.ge.f32.partialorder %v237, 0.0
        %v242 = vmul.f32 %v234, 0.1
        %v243 = vmul.f32 %v237, 0.1
        %v244 = vsel %vm240, %v234, %v242
        %v245 = vsel %vm241, %v237, %v243
        %vm246 = vcmask 130048
        %247 = vst.msk [vmem:[%s163] sm:$0xff] %vm246, %v244
        %248 = vst.msk [vmem:[%s163 + $0x8] sm:$0xff] %vm246, %v245
        %s249 = sand.u32 %s93, 1
        %s250 = scalar_lea.sflag [#allocation3], %s249
        %s251 = sand.u32 %s93, 1
        %s252 = smul.addr %s251, 16
        %s253 = scalar_lea.vmem [#allocation2], %s252
        // Predicated region
        $region33: #{tpu_custom_call.1} parent=31 // pred_check
          %p254 = pneg %p103
        $region34: #{tpu_custom_call.1} parent=31 // pred_check_branch
          %256 = sbr.rel (%p254) target = $region36
        $region35: #{tpu_custom_call.1} parent=31 // pred_region
          %s258 = ssub.s32 256, 256
          %259 = vsyncadd %s250, %s258
          %s260 = smul.addr %s17, 2
          %s261 = smul.addr %s260, 128
          %s262 = scalar_lea.hbm %s3, %s261
          %s263 = sshll.u32 %s253, 4
          %s264 = int_to_ptr.vmem [resolvable:$true] %s263
          %269 = dma.vmem_to_hbm [thread:$0]  %s264, 256, %s262, %s250, 128, 128, 8
        $region36: #{tpu_custom_call.1} parent=31 // pred_fallthru
          _
      $region32: #{tpu_custom_call.1} parent=5 // pred_fallthru
        _
      %p270 = scmp.le.s32.totalorder 2, %s12
      // Predicated region
      $region37: #{tpu_custom_call.1} parent=5 // pred_check
        %p271 = pneg %p270
      $region38: #{tpu_custom_call.1} parent=5 // pred_check_branch
        %273 = sbr.rel (%p271) target = $region40
      $region39: #{tpu_custom_call.1} parent=5 // pred_region
        %s274 = ssub.s32 %s12, 2
        // Predicated region
        $region41: #{tpu_custom_call.1} parent=39 // pred_check
          %p275 = pneg %p109
        $region42: #{tpu_custom_call.1} parent=39 // pred_check_branch
          %277 = sbr.rel (%p275) target = $region44
        $region43: #{tpu_custom_call.1} parent=39 // pred_region
          %s278 = sand.u32 %s94, 1
          %s279 = scalar_lea.sflag [#allocation3], %s278
          %s280 = sand.u32 %s94, 1
          %s281 = smul.addr %s280, 16
          %s282 = scalar_lea.vmem [#allocation2], %s281
          %283 = dma.done %s279, 256
        $region44: #{tpu_custom_call.1} parent=39 // pred_fallthru
          _
      $region40: #{tpu_custom_call.1} parent=5 // pred_fallthru
        _
    $region6: #{tpu_custom_call.1} parent=1 // loop_footer
      %s16 = sadd.s32 1, %s12
    $region7: #{tpu_custom_call.1} parent=1 // loop_footer_branch
      %11 = sbr.rel target = $region3
    $region8: #{tpu_custom_call.1} parent=1 // loop_exit
      _
    %284 = vsyncpa [#allocation3], 1
    %s285 = scalar_lea.sflag [#allocation3], 1
    %286 = vsyncpa %s285, 1

</llo_original>
